<compile_context>
chip_gen: v7x
topology: tpu7x:2x2x1
jax: 0.10.0
libtpu: 0.0.40
codegen_flags: <defaults>
</compile_context>

<pallas_src>
import jax
import jax.numpy as jnp
from jax.experimental import pallas as pl
from jax.experimental.pallas import tpu as pltpu


def _tiling_kernel(vals_ref, o_ref):
    # vals_ref: (1, 1, CCT)  -- channel row for this output batch (already CT-tiled)
    # o_ref:    (1, TH, WT, CCT)
    row = vals_ref[...].reshape(1, 1, 1, vals_ref.shape[-1])
    o_ref[...] = jnp.broadcast_to(row, o_ref.shape)


def _largest_divisor_tile(total, bytes_per_unit, budget_bytes):
    best = 1
    for t in range(1, total + 1):
        if total % t == 0 and t * bytes_per_unit <= budget_bytes:
            best = t
    return best


def tiling_nhwc_forward(x, tiles, *, block_budget_bytes=1 << 20):
    """Forward pass of TilingNHWC. x: (N, C, H, W); tiles = (NT, CT, HT, WT)."""
    N, C, H, W = x.shape
    NT, CT, HT, WT = tiles
    NOUT, CCT = N * NT, C * CT
    itemsize = jnp.dtype(x.dtype).itemsize

    # glue: faithful as_strided gather of the first N*C raw-storage elements, plus
    # the tiny channel-axis replication; shaped (N, 1, C*CT) so the lane dim (C*CT)
    # equals the full array dim -> clean, lane-dense BlockSpec.
    vals = jnp.reshape(x, (-1,))[: N * C].reshape(N, C)
    vals = jnp.tile(vals, (1, CT)).reshape(N, 1, CCT)

    # Spatial H tile: largest divisor of HT whose (TH, WT, CCT) block fits the budget.
    TH = _largest_divisor_tile(HT, WT * CCT * itemsize, block_budget_bytes)
    grid = (NOUT, HT // TH)

    out_nhwc = pl.pallas_call(
        _tiling_kernel,
        out_shape=jax.ShapeDtypeStruct((NOUT, HT, WT, CCT), x.dtype),
        grid_spec=pltpu.PrefetchScalarGridSpec(
            num_scalar_prefetch=0,
            grid=grid,
            in_specs=[
                # batch tiling (NT repeat) done here: output batch n reads input n % N
                pl.BlockSpec((1, 1, CCT), lambda n, h: (n % N, 0, 0)),
            ],
            out_specs=pl.BlockSpec((1, TH, WT, CCT), lambda n, h: (n, h, 0, 0)),
        ),
        compiler_params=pltpu.CompilerParams(
            dimension_semantics=("parallel", "parallel"),
            vmem_limit_bytes=32 * 1024 * 1024,
        ),
    )(vals)

    # glue: NHWC -> NCHW to match the PyTorch logical output shape.
    return jnp.transpose(out_nhwc, (0, 3, 1, 2))


def reference_forward(x, tiles):
    N, C, H, W = x.shape
    NT, CT, HT, WT = tiles
    vals = jnp.reshape(x, (-1,))[: N * C].reshape(N, 1, 1, C)
    tiled = jnp.tile(vals, (NT, HT, WT, CT))           # (N*NT, HT, WT, C*CT)
    return jnp.transpose(tiled, (0, 3, 1, 2))          # (N*NT, C*CT, HT, WT)


if __name__ == "__main__":
    # Typical deepCam use: broadcast global-average-pooled features (N, C, 1, 1)
    # to a spatial map, with batch/channel replication factors from `tiles`.
    N, C, H, W = 2, 4, 1, 1
    tiles = (2, 32, 16, 16)   # (NT, CT, HT, WT)  -> output (4, 128, 16, 16)

    key = jax.random.PRNGKey(0)
    x = jax.random.normal(key, (N, C, H, W), dtype=jnp.float32)

    out = tiling_nhwc_forward(x, tiles)
    out = jax.block_until_ready(out)

    ref = reference_forward(x, tiles)
    assert out.shape == (N * tiles[0], C * tiles[1], tiles[2], tiles[3]), out.shape
    assert jnp.array_equal(out, ref), "mismatch vs reference"

    print("KERNEL_OK")
</pallas_src>

<mosaic_0001>
module attributes {stable_mosaic.version = 11 : i64} {
  func.func @_tiling_kernel(%arg0: i32, %arg1: i32, %arg2: memref<1x1x128xf32, #tpu.memory_space<vmem>>, %arg3: memref<1x16x16x128xf32, #tpu.memory_space<vmem>>) attributes {dimension_semantics = [#tpu.dimension_semantics<parallel>, #tpu.dimension_semantics<parallel>], iteration_bounds = array<i64: 4, 1>, scalar_prefetch = 0 : i64, scratch_operands = 0 : i64, tpu.core_type = #tpu.core_type<tc>, window_params = [{transform_indices = @transform_0, window_bounds = array<i64: 1, 1, 128>}, {transform_indices = @transform_1, window_bounds = array<i64: 1, 16, 16, 128>}]} {
    %c0 = arith.constant 0 : index
    %c0_0 = arith.constant 0 : index
    %c0_1 = arith.constant 0 : index
    %0 = vector.load %arg2[%c0, %c0_0, %c0_1] : memref<1x1x128xf32, #tpu.memory_space<vmem>>, vector<1x1x128xf32>
    %1 = vector.shape_cast %0 : vector<1x1x128xf32> to vector<1x1x1x128xf32>
    %2 = vector.shape_cast %1 : vector<1x1x1x128xf32> to vector<1x1x1x128xf32>
    %3 = vector.broadcast %2 : vector<1x1x1x128xf32> to vector<1x16x16x128xf32>
    %c0_2 = arith.constant 0 : index
    %c0_3 = arith.constant 0 : index
    %c0_4 = arith.constant 0 : index
    %c0_5 = arith.constant 0 : index
    %4 = vector.load %arg3[%c0_2, %c0_3, %c0_4, %c0_5] : memref<1x16x16x128xf32, #tpu.memory_space<vmem>>, vector<1x16x16x128xf32>
    tpu.vector_store %arg3[%c0_2, %c0_3, %c0_4, %c0_5], %3 {strides = array<i32>} : memref<1x16x16x128xf32, #tpu.memory_space<vmem>>, vector<1x16x16x128xf32>,
    return
  }
  func.func @transform_0(%arg0: i32, %arg1: i32) -> (i32, i32, i32) {
    %c2_i32 = arith.constant 2 : i32
    %c0_i32 = arith.constant 0 : i32
    %0 = arith.cmpi eq, %c2_i32, %c0_i32 : i32
    %c1_i32 = arith.constant 1 : i32
    %1 = arith.select %0, %c1_i32, %c2_i32 : i32
    %2 = arith.remsi %arg0, %1 : i32
    %c0_i32_0 = arith.constant 0 : i32
    %3 = arith.cmpi ne, %2, %c0_i32_0 : i32
    %c0_i32_1 = arith.constant 0 : i32
    %4 = arith.cmpi slt, %2, %c0_i32_1 : i32
    %c0_i32_2 = arith.constant 0 : i32
    %5 = arith.cmpi slt, %1, %c0_i32_2 : i32
    %6 = arith.xori %4, %5 : i1
    %7 = arith.andi %6, %3 : i1
    %8 = arith.addi %2, %1 : i32
    %9 = arith.select %7, %8, %2 : i32
    %c0_i32_3 = arith.constant 0 : i32
    %c0_i32_4 = arith.constant 0 : i32
    %c0_i32_5 = arith.constant 0 : i32
    return %9, %c0_i32_3, %c0_i32_4 : i32, i32, i32
  }
  func.func @transform_1(%arg0: i32, %arg1: i32) -> (i32, i32, i32, i32) {
    %c0_i32 = arith.constant 0 : i32
    %c0_i32_0 = arith.constant 0 : i32
    %c0_i32_1 = arith.constant 0 : i32
    return %arg0, %arg1, %c0_i32, %c0_i32_0 : i32, i32, i32, i32
  }
}

</mosaic_0001>

<llo_original>
// kernel: tpu_custom_call.1
$region0: #{tpu_custom_call.1}
  #allocation0 [shape = 'u32[]', space=smem, size = 0x4, offset = 0x4, fixed_abs, tag = 'smem constant byte address 0x4 - core index']
  #allocation1 [shape = 'u32[144,128]{1,0:T(1,128)}', space=vmem, size = 0x12000, scoped, tag = 'internal scratch']
  %s0 = inlined_call_operand.hbm [shape: f32[2,1,128], index: 0, kind: input, shape index: {}]
  %s1 = inlined_call_operand.hbm [shape: f32[4,16,16,128], index: 1, kind: output, shape index: {}]
  %s2 = sld [smem:[#allocation0]]
  $region41: #{tpu_custom_call.1} parent=0
    _
  %s4 = ssub.s32 1, %s2
  %s5 = scalar_select 0, %s4, %s2
  $region1: #{tpu_custom_call.1} parent=0
    #allocation2 [shape = 'u8[1024]{0}', space=vmem, size = 0x400, scoped, tag = 'input window, operand 0']
    #allocation3 [shape = 's32[2]{0}', space=sflag, size = 0x8, scoped, tag = 'scoped memory for tpu_custom_call.1']
    #allocation4 [shape = 's32[2]{0}', space=sflag, size = 0x8, scoped, tag = 'scoped memory for tpu_custom_call.1']
    #allocation5 [shape = 'u8[262144]{0}', space=vmem, size = 0x40000, scoped, tag = 'output window, operand 0']
    %6 = vsyncpa [#allocation3], 0
    %s7 = scalar_lea.sflag [#allocation3], 1
    %8 = vsyncpa %s7, 0
    %9 = vsyncpa [#allocation4], 0
    %s10 = scalar_lea.sflag [#allocation4], 1
    %11 = vsyncpa %s10, 0
    loop: start=0, step=1, limit=6
    $region2: #{tpu_custom_call.1} parent=1 // loop_pre_header
      _
    $region3: #{tpu_custom_call.1} parent=1 // loop_header
      %s13 = sphi 0, %s17
      %p14 = scmp.ge.s32.totalorder %s13, 6
      %s20 = sphi 0, %s32
      %s21 = sphi 0, %s28
      %s22 = sphi 0, %s20
      %s23 = sphi 0, %s21
      %s24 = sphi 0, %s22
      %s25 = sphi 0, %s23
      %s59 = sphi 0, %s61
      %s62 = sphi 0, %s59
      %s63 = sphi 0, %s62
      %s79 = sphi 0, %s63
      %s87 = sphi 0, %s89
      %s90 = sphi 0, %s87
      %s91 = sphi 0, %s90
      %s107 = sphi 0, %s91
    $region4: #{tpu_custom_call.1} parent=1 // loop_header_branch
      %16 = sbr.rel (%p14) target = $region8
    $region5: #{tpu_custom_call.1} parent=1 // loop_body
      %s18 = ssub.s32 %s13, 1
      %s19 = ssub.s32 %s13, 2
      %s26 = sadd.s32 1, %s21
      %p27 = scmp.ge.s32.totalorder %s26, 1
      %s28 = scalar_select %p27, 0, %s26
      %s29 = sadd.s32 1, %s20
      %s30 = scalar_select %p27, %s29, %s20
      %p31 = scmp.ge.s32.totalorder %s30, 4
      %s32 = scalar_select %p31, 0, %s30
      %p33 = scmp.lt.s32.totalorder %s20, 0
      %s34 = ssub.s32 0, %s20
      %s35 = scalar_select %p33, %s34, %s20
      %s36 = sand.u32 %s35, 1
      %s37 = ssub.s32 0, %s36
      %s38 = scalar_select %p33, %s37, %s36
      %p39 = scmp.ne.s32.totalorder %s38, 0
      %p40 = scmp.lt.s32.totalorder %s38, 0
      %p41 = pnand %p40, %p39
      %p42 = pneg %p41
      %s43 = sadd.s32 %s38, 2
      %s44 = scalar_select %p42, %s43, %s38
      %p45 = scmp.lt.s32.totalorder %s32, 0
      %s46 = ssub.s32 0, %s32
      %s47 = scalar_select %p45, %s46, %s32
      %s48 = sand.u32 %s47, 1
      %s49 = ssub.s32 0, %s48
      %s50 = scalar_select %p45, %s49, %s48
      %p51 = scmp.ne.s32.totalorder %s50, 0
      %p52 = scmp.lt.s32.totalorder %s50, 0
      %p53 = pnand %p52, %p51
      %p54 = pneg %p53
      %s55 = sadd.s32 %s50, 2
      %s56 = scalar_select %p54, %s55, %s50
      %s57 = ssub.s32 %s44, %s56
      %p58 = scmp.eq.s32.totalorder %s57, 0
      %s60 = sadd.s32 %s59, 1
      %s61 = scalar_select %p58, %s59, %s60
      %p64 = pneg %p58
      %p65 = scmp.eq.s32.totalorder %s13, 3
      %p66 = por %p64, %p65
      %p67 = scmp.ne.s32.totalorder %s59, %s62
      %p68 = scmp.eq.s32.totalorder %s13, 0
      %p69 = por %p67, %p68
      %p70 = scmp.ne.s32.totalorder %s59, %s62
      %p71 = scmp.eq.s32.totalorder %s18, 3
      %p72 = por %p70, %p71
      %p73 = scmp.ne.s32.totalorder %s62, %s63
      %p74 = scmp.eq.s32.totalorder %s18, 0
      %p75 = por %p73, %p74
      %p76 = scmp.ne.s32.totalorder %s62, %s63
      %p77 = scmp.eq.s32.totalorder %s19, 3
      %p78 = por %p76, %p77
      %p80 = scmp.ne.s32.totalorder %s63, %s79
      %p81 = scmp.eq.s32.totalorder %s19, 0
      %p82 = por %p80, %p81
      %s83 = ssub.s32 %s20, %s32
      %s84 = ssub.s32 %s21, %s28
      %s85 = sor.u32 %s83, %s84
      %p86 = scmp.eq.s32.totalorder %s85, 0
      %s88 = sadd.s32 %s87, 1
      %s89 = scalar_select %p86, %s87, %s88
      %p92 = pneg %p86
      %p93 = scmp.eq.s32.totalorder %s13, 3
      %p94 = por %p92, %p93
      %p95 = scmp.ne.s32.totalorder %s87, %s90
      %p96 = scmp.eq.s32.totalorder %s13, 0
      %p97 = por %p95, %p96
      %p98 = scmp.ne.s32.totalorder %s87, %s90
      %p99 = scmp.eq.s32.totalorder %s18, 3
      %p100 = por %p98, %p99
      %p101 = scmp.ne.s32.totalorder %s90, %s91
      %p102 = scmp.eq.s32.totalorder %s18, 0
      %p103 = por %p101, %p102
      %p104 = scmp.ne.s32.totalorder %s90, %s91
      %p105 = scmp.eq.s32.totalorder %s19, 3
      %p106 = por %p104, %p105
      %p108 = scmp.ne.s32.totalorder %s91, %s107
      %p109 = scmp.eq.s32.totalorder %s19, 0
      %p110 = por %p108, %p109
      %p111 = scmp.le.s32.totalorder 1, %s13
      %p112 = scmp.lt.s32.totalorder %s13, 5
      %p113 = pnand %p111, %p112
      %p114 = pneg %p113
      // Predicated region
      $region9: #{tpu_custom_call.1} parent=5 // pred_check
        _
      $region10: #{tpu_custom_call.1} parent=5 // pred_check_branch
        %116 = sbr.rel (%p113) target = $region12
      $region11: #{tpu_custom_call.1} parent=5 // pred_region
        %s117 = ssub.s32 %s13, 1
      $region12: #{tpu_custom_call.1} parent=5 // pred_fallthru
        _
      %p118 = scmp.lt.s32.totalorder %s13, 4
      // Predicated region
      $region13: #{tpu_custom_call.1} parent=5 // pred_check
        %p119 = pneg %p118
      $region14: #{tpu_custom_call.1} parent=5 // pred_check_branch
        %121 = sbr.rel (%p119) target = $region16
      $region15: #{tpu_custom_call.1} parent=5 // pred_region
        // Predicated region
        $region17: #{tpu_custom_call.1} parent=15 // pred_check
          %p122 = pneg %p69
        $region18: #{tpu_custom_call.1} parent=15 // pred_check_branch
          %124 = sbr.rel (%p122) target = $region20
        $region19: #{tpu_custom_call.1} parent=15 // pred_region
          %s125 = sand.u32 %s59, 1
          %s126 = scalar_lea.sflag [#allocation3], %s125
          %s127 = sand.u32 %s59, 1
          %s128 = scalar_lea.vmem [#allocation2], %s127
          %p129 = scmp.lt.s32.totalorder %s20, 0
          %s130 = ssub.s32 0, %s20
          %s131 = scalar_select %p129, %s130, %s20
          %s132 = sand.u32 %s131, 1
          %s133 = ssub.s32 0, %s132
          %s134 = scalar_select %p129, %s133, %s132
          %p135 = scmp.ne.s32.totalorder %s134, 0
          %p136 = scmp.lt.s32.totalorder %s134, 0
          %p137 = pnand %p136, %p135
          %p138 = pneg %p137
          %s139 = sadd.s32 %s134, 2
          %s140 = scalar_select %p138, %s139, %s134
          %s142 = ssub.s32 16, 16
          %143 = vsyncadd %s126, %s142
          %s144 = smul.addr %s140, 16
          %s145 = scalar_lea.hbm %s0, %s144
          %s147 = sshll.u32 %s128, 4
          %s148 = int_to_ptr.vmem [resolvable:$true] %s147
          %150 = dma.hbm_to_vmem [thread:$0]  %s145, 16, %s148, %s126
        $region20: #{tpu_custom_call.1} parent=15 // pred_fallthru
          _
      $region16: #{tpu_custom_call.1} parent=5 // pred_fallthru
        _
      %p151 = scmp.le.s32.totalorder 1, %s13
      %p152 = scmp.lt.s32.totalorder %s13, 5
      %p153 = pnand %p151, %p152
      %p154 = pneg %p153
      // Predicated region
      $region21: #{tpu_custom_call.1} parent=5 // pred_check
        _
      $region22: #{tpu_custom_call.1} parent=5 // pred_check_branch
        %156 = sbr.rel (%p153) target = $region24
      $region23: #{tpu_custom_call.1} parent=5 // pred_region
        %s157 = ssub.s32 %s13, 1
        %s158 = sand.u32 %s62, 1
        %s159 = scalar_lea.sflag [#allocation3], %s158
        %s160 = sand.u32 %s62, 1
        %s161 = scalar_lea.vmem [#allocation2], %s160
        // Predicated region
        $region25: #{tpu_custom_call.1} parent=23 // pred_check
          %p162 = pneg %p75
        $region26: #{tpu_custom_call.1} parent=23 // pred_check_branch
          %164 = sbr.rel (%p162) target = $region28
        $region27: #{tpu_custom_call.1} parent=23 // pred_region
          %165 = dma.done %s159, 16
        $region28: #{tpu_custom_call.1} parent=23 // pred_fallthru
          _
        %s166 = sand.u32 %s62, 1
        %s167 = scalar_lea.sflag [#allocation3], %s166
        %s168 = sand.u32 %s62, 1
        %s169 = scalar_lea.vmem [#allocation2], %s168
        %p170 = pneg %p75
        %p171 = pneg %p72
        %p172 = pneg %p103
        %p173 = pneg %p100
        %s174 = sand.u32 %s90, 1
        %s175 = scalar_lea.sflag [#allocation4], %s174
        %s176 = sand.u32 %s90, 1
        %s177 = smul.addr %s176, 256
        %s178 = scalar_lea.vmem [#allocation5], %s177
        %p179 = scmp.lt.s32.totalorder %s22, 0
        %s180 = ssub.s32 0, %s22
        %s181 = scalar_select %p179, %s180, %s22
        %s182 = sand.u32 %s181, 1
        %s183 = ssub.s32 0, %s182
        %s184 = scalar_select %p179, %s183, %s182
        %p185 = scmp.ne.s32.totalorder %s184, 0
        %p186 = scmp.lt.s32.totalorder %s184, 0
        %p187 = pnand %p186, %p185
        %p188 = pneg %p187
        %s189 = sadd.s32 %s184, 2
        %s190 = scalar_select %p188, %s189, %s184
        %s191 = smul.u32 16, %s23
        %v192 = vld [vmem:[%s161] sm:$0x1]
        %v194 = vlaneseq
        %v195 = vshrl.u32 %v194, 7
        %v196 = vsub.s32 0, %v195
        %v197 = vrot.slane %v192, %v196
        %199 = vst [vmem:[%s178] sm:$0xff] %v197
        %200 = vst [vmem:[%s178 + $0x8] sm:$0xff] %v197
        %201 = vst [vmem:[%s178 + $0x10] sm:$0xff] %v197
        %202 = vst [vmem:[%s178 + $0x18] sm:$0xff] %v197
        %203 = vst [vmem:[%s178 + $0x20] sm:$0xff] %v197
        %204 = vst [vmem:[%s178 + $0x28] sm:$0xff] %v197
        %205 = vst [vmem:[%s178 + $0x30] sm:$0xff] %v197
        %206 = vst [vmem:[%s178 + $0x38] sm:$0xff] %v197
        %207 = vst [vmem:[%s178 + $0x40] sm:$0xff] %v197
        %208 = vst [vmem:[%s178 + $0x48] sm:$0xff] %v197
        %209 = vst [vmem:[%s178 + $0x50] sm:$0xff] %v197
        %210 = vst [vmem:[%s178 + $0x58] sm:$0xff] %v197
        %211 = vst [vmem:[%s178 + $0x60] sm:$0xff] %v197
        %212 = vst [vmem:[%s178 + $0x68] sm:$0xff] %v197
        %213 = vst [vmem:[%s178 + $0x70] sm:$0xff] %v197
        %214 = vst [vmem:[%s178 + $0x78] sm:$0xff] %v197
        %215 = vst [vmem:[%s178 + $0x80] sm:$0xff] %v197
        %216 = vst [vmem:[%s178 + $0x88] sm:$0xff] %v197
        %217 = vst [vmem:[%s178 + $0x90] sm:$0xff] %v197
        %218 = vst [vmem:[%s178 + $0x98] sm:$0xff] %v197
        %219 = vst [vmem:[%s178 + $0xa0] sm:$0xff] %v197
        %220 = vst [vmem:[%s178 + $0xa8] sm:$0xff] %v197
        %221 = vst [vmem:[%s178 + $0xb0] sm:$0xff] %v197
        %222 = vst [vmem:[%s178 + $0xb8] sm:$0xff] %v197
        %223 = vst [vmem:[%s178 + $0xc0] sm:$0xff] %v197
        %224 = vst [vmem:[%s178 + $0xc8] sm:$0xff] %v197
        %225 = vst [vmem:[%s178 + $0xd0] sm:$0xff] %v197
        %226 = vst [vmem:[%s178 + $0xd8] sm:$0xff] %v197
        %227 = vst [vmem:[%s178 + $0xe0] sm:$0xff] %v197
        %228 = vst [vmem:[%s178 + $0xe8] sm:$0xff] %v197
        %229 = vst [vmem:[%s178 + $0xf0] sm:$0xff] %v197
        %230 = vst [vmem:[%s178 + $0xf8] sm:$0xff] %v197
        %s231 = sand.u32 %s90, 1
        %s232 = scalar_lea.sflag [#allocation4], %s231
        %s233 = sand.u32 %s90, 1
        %s234 = smul.addr %s233, 256
        %s235 = scalar_lea.vmem [#allocation5], %s234
        // Predicated region
        $region29: #{tpu_custom_call.1} parent=23 // pred_check
          %p236 = pneg %p100
        $region30: #{tpu_custom_call.1} parent=23 // pred_check_branch
          %238 = sbr.rel (%p236) target = $region32
        $region31: #{tpu_custom_call.1} parent=23 // pred_region
          %s239 = smul.u32 16, %s23
          %s241 = ssub.s32 4096, 4096
          %242 = vsyncadd %s232, %s241
          %s243 = smul.addr %s239, 2
          %s244 = smul.addr %s22, 32
          %s245 = sadd.s32 %s243, %s244
          %s246 = smul.addr %s245, 128
          %s247 = scalar_lea.hbm %s1, %s246
          %s248 = sshll.u32 %s235, 4
          %s249 = int_to_ptr.vmem [resolvable:$true] %s248
          %254 = dma.vmem_to_hbm [thread:$0]  %s249, 4096, %s247, %s232, 128, 128, 8
        $region32: #{tpu_custom_call.1} parent=23 // pred_fallthru
          _
      $region24: #{tpu_custom_call.1} parent=5 // pred_fallthru
        _
      %p255 = scmp.le.s32.totalorder 2, %s13
      // Predicated region
      $region33: #{tpu_custom_call.1} parent=5 // pred_check
        %p256 = pneg %p255
      $region34: #{tpu_custom_call.1} parent=5 // pred_check_branch
        %258 = sbr.rel (%p256) target = $region36
      $region35: #{tpu_custom_call.1} parent=5 // pred_region
        %s259 = ssub.s32 %s13, 2
        // Predicated region
        $region37: #{tpu_custom_call.1} parent=35 // pred_check
          %p260 = pneg %p106
        $region38: #{tpu_custom_call.1} parent=35 // pred_check_branch
          %262 = sbr.rel (%p260) target = $region40
        $region39: #{tpu_custom_call.1} parent=35 // pred_region
          %s263 = sand.u32 %s91, 1
          %s264 = scalar_lea.sflag [#allocation4], %s263
          %s265 = sand.u32 %s91, 1
          %s266 = smul.addr %s265, 256
          %s267 = scalar_lea.vmem [#allocation5], %s266
          %268 = dma.done %s264, 4096
        $region40: #{tpu_custom_call.1} parent=35 // pred_fallthru
          _
      $region36: #{tpu_custom_call.1} parent=5 // pred_fallthru
        _
    $region6: #{tpu_custom_call.1} parent=1 // loop_footer
      %s17 = sadd.s32 1, %s13
    $region7: #{tpu_custom_call.1} parent=1 // loop_footer_branch
      %12 = sbr.rel target = $region3
    $region8: #{tpu_custom_call.1} parent=1 // loop_exit
      _
    %269 = vsyncpa [#allocation3], 1
    %s270 = scalar_lea.sflag [#allocation3], 1
    %271 = vsyncpa %s270, 1
    %272 = vsyncpa [#allocation4], 1
    %s273 = scalar_lea.sflag [#allocation4], 1
    %274 = vsyncpa %s273, 1

</llo_original>
